<compile_context>
chip_gen: v7x
topology: tpu7x:2x2x1
jax: 0.10.0
libtpu: 0.0.40
codegen_flags: <defaults>
</compile_context>

<pallas_src>
import jax
import jax.numpy as jnp
from jax.experimental import pallas as pl
from jax.experimental.pallas import tpu as pltpu

_EPS = 1e-5


def _round_up(n, m):
    return ((n + m - 1) // m) * m


def _cdiv(a, b):
    return -(-a // b)


def _make_stats_kernel(n_valid, tb, nb_half, b_pad):
    """Pass 1: per-core-half partial sum / sum-of-squares over the batch of
    z2 = relu(x @ W1.T + b1) @ W2.T (row-major, batch on sublanes)."""

    def kernel(x_ref, w1t_ref, b1_ref, w2t_ref, sum_ref, sumsq_ref,
               acc_ref, acc2_ref):
        c = pl.program_id(0)          # core-half (parallel; megacore on v7x)
        i = pl.program_id(1)          # batch tile within the half (arbitrary)

        @pl.when(i == 0)
        def _():
            acc_ref[...] = jnp.zeros_like(acc_ref)
            acc2_ref[...] = jnp.zeros_like(acc2_ref)

        x = x_ref[...].astype(w1t_ref.dtype)                     # [TB, 48]
        h1 = jnp.dot(x, w1t_ref[...],
                     preferred_element_type=jnp.float32) + b1_ref[...]
        h1 = jnp.maximum(h1, 0.0)                                # [TB, 32] f32
        z2 = jnp.dot(h1.astype(w2t_ref.dtype), w2t_ref[...],
                     preferred_element_type=jnp.float32)         # [TB, 32] f32

        if b_pad != n_valid:
            # Mask padded batch rows out of the statistics.
            row = (c * nb_half + i) * tb + jax.lax.broadcasted_iota(
                jnp.int32, z2.shape, 0)
            valid = row < n_valid
            z2_s = jnp.where(valid, z2, 0.0)
            z2_q = jnp.where(valid, z2 * z2, 0.0)
        else:
            z2_s = z2
            z2_q = z2 * z2

        # Per-tile sublane reduction into tiny f32 accumulators (XLU is free
        # filler in this HBM-bound kernel; scratch no longer scales with TB).
        acc_ref[...] += jnp.sum(z2_s, axis=0, keepdims=True)     # [1, 32]
        acc2_ref[...] += jnp.sum(z2_q, axis=0, keepdims=True)    # [1, 32]

        @pl.when(i == nb_half - 1)
        def _():
            sum_ref[0] = acc_ref[...]
            sumsq_ref[0] = acc2_ref[...]

    return kernel


def _forward_kernel(x_ref, w1t_ref, b1_ref, w2ts_ref, shift_ref,
                    w3t_ref, b3_ref, o_ref):
    """Pass 2: fused forward for one batch tile (BN scale folded into W2)."""
    x = x_ref[...].astype(w1t_ref.dtype)                         # [TB, 48]
    h1 = jnp.maximum(
        jnp.dot(x, w1t_ref[...], preferred_element_type=jnp.float32)
        + b1_ref[...], 0.0)                                      # [TB, 32]
    z2 = jnp.dot(h1.astype(w2ts_ref.dtype), w2ts_ref[...],
                 preferred_element_type=jnp.float32)             # scale folded
    h2 = jnp.maximum(z2 + shift_ref[...], 0.0)                   # BN + ReLU
    y = jnp.dot(h2.astype(w3t_ref.dtype), w3t_ref[...],
                preferred_element_type=jnp.float32) + b3_ref[...]
    o_ref[...] = jax.nn.sigmoid(y).astype(o_ref.dtype)           # [TB, 48]


def fully_connected_forward(x, params, *, tb=2048, io_dtype=jnp.bfloat16,
                            out_dtype=None):
    """x: [B, 48] (any float dtype).  params: PyTorch-layout weights/biases."""
    B, F = x.shape
    assert F == 48
    out_dtype = io_dtype if out_dtype is None else out_dtype
    f32 = jnp.float32

    TB = max(8, min(int(tb), _round_up(B, 8)))      # batch tile (sublane axis)
    TB = _round_up(TB, 8)
    nb_total = _cdiv(B, TB)
    n_split = 2 if nb_total >= 2 else 1             # v7x: 2 TCs on pass-1 stats
    nb_half = _cdiv(nb_total, n_split)
    B_pad = n_split * nb_half * TB
    nb = B_pad // TB

    # Native layout: no transpose / cast pass in the wrapper.  Pad only if the
    # batch is ragged w.r.t. the tile.
    x_pad = x if B_pad == B else jnp.pad(x, ((0, B_pad - B), (0, 0)))

    w1t = params["w1"].T.astype(io_dtype)                    # [48, 32]
    b1 = params["b1"].reshape(1, 32).astype(f32)
    w2_f32 = params["w2"].astype(f32)                        # [32, 32]
    w2t = w2_f32.T.astype(io_dtype)
    # params["b2"] intentionally unused: cancelled exactly by training-mode BN.
    gamma = params["gamma"].astype(f32)
    beta = params["beta"].astype(f32)
    w3t = params["w3"].T.astype(io_dtype)                    # [32, 48]
    b3 = params["b3"].reshape(1, 48).astype(f32)

    # ---- Pass 1: partial full-batch BN statistics of z2 ---------------------
    sums, sumsqs = pl.pallas_call(
        _make_stats_kernel(B, TB, nb_half, B_pad),
        out_shape=(jax.ShapeDtypeStruct((n_split, 1, 32), f32),
                   jax.ShapeDtypeStruct((n_split, 1, 32), f32)),
        grid_spec=pltpu.PrefetchScalarGridSpec(
            num_scalar_prefetch=0,
            grid=(n_split, nb_half),
            in_specs=[
                pl.BlockSpec((TB, 48), lambda c, i: (c * nb_half + i, 0)),
                pl.BlockSpec((48, 32), lambda c, i: (0, 0)),   # w1.T
                pl.BlockSpec((1, 32), lambda c, i: (0, 0)),    # b1
                pl.BlockSpec((32, 32), lambda c, i: (0, 0)),   # w2.T
            ],
            out_specs=[pl.BlockSpec((1, 1, 32), lambda c, i: (c, 0, 0)),
                       pl.BlockSpec((1, 1, 32), lambda c, i: (c, 0, 0))],
            scratch_shapes=[pltpu.VMEM((1, 32), f32),
                            pltpu.VMEM((1, 32), f32)],
        ),
        compiler_params=pltpu.CompilerParams(
            dimension_semantics=("parallel", "arbitrary"),
            vmem_limit_bytes=32 * 1024 * 1024),
    )(x_pad, w1t, b1, w2t)

    # Tiny XLA epilogue: combine the per-core partials, build the folded BN
    # affine and fold the scale into W2 (removes one [TB,32] VPU mul/tile).
    s1 = jnp.sum(sums, axis=(0, 1))                          # [32]
    s2 = jnp.sum(sumsqs, axis=(0, 1))                        # [32]
    inv_n = 1.0 / float(B)
    mean = s1 * inv_n
    var = jnp.maximum(s2 * inv_n - mean * mean, 0.0)         # biased variance
    scale = gamma * jax.lax.rsqrt(var + _EPS)
    shift = (beta - mean * scale).reshape(1, 32).astype(f32)
    w2ts = (w2_f32 * scale.reshape(32, 1)).T.astype(io_dtype)   # [32, 32]

    # ---- Pass 2: fused forward, batch tiles independent ----------------------
    out = pl.pallas_call(
        _forward_kernel,
        out_shape=jax.ShapeDtypeStruct((B_pad, 48), out_dtype),
        grid_spec=pltpu.PrefetchScalarGridSpec(
            num_scalar_prefetch=0,
            grid=(nb,),
            in_specs=[
                pl.BlockSpec((TB, 48), lambda i: (i, 0)),     # x tile (native)
                pl.BlockSpec((48, 32), lambda i: (0, 0)),     # w1.T
                pl.BlockSpec((1, 32), lambda i: (0, 0)),      # b1
                pl.BlockSpec((32, 32), lambda i: (0, 0)),     # (scale*w2).T
                pl.BlockSpec((1, 32), lambda i: (0, 0)),      # BN shift
                pl.BlockSpec((32, 48), lambda i: (0, 0)),     # w3.T
                pl.BlockSpec((1, 48), lambda i: (0, 0)),      # b3
            ],
            out_specs=pl.BlockSpec((TB, 48), lambda i: (i, 0)),
        ),
        compiler_params=pltpu.CompilerParams(
            dimension_semantics=("parallel",),                # megacore shard
            vmem_limit_bytes=32 * 1024 * 1024),
    )(x_pad, w1t, b1, w2ts, shift, w3t, b3)

    return out if B_pad == B else out[:B]                     # [B, 48]


def init_params(key):
    """PyTorch-layout parameters ([out_features, in_features] weights)."""
    ks = jax.random.split(key, 8)
    w1 = jax.random.normal(ks[0], (32, 48), jnp.float32) * 0.1
    b1 = jax.random.normal(ks[1], (32,), jnp.float32) * 0.1
    w2 = jax.random.normal(ks[2], (32, 32), jnp.float32) * 0.1
    b2 = jax.random.normal(ks[3], (32,), jnp.float32) * 0.1  # cancelled by BN
    gamma = 1.0 + 0.1 * jax.random.normal(ks[4], (32,), jnp.float32)
    beta = 0.1 * jax.random.normal(ks[5], (32,), jnp.float32)
    w3 = jax.random.normal(ks[6], (48, 32), jnp.float32) * 0.1
    b3 = jax.random.normal(ks[7], (48,), jnp.float32) * 0.1
    return dict(w1=w1, b1=b1, w2=w2, b2=b2, gamma=gamma, beta=beta,
                w3=w3, b3=b3)


def _reference(x, params):
    """Pure-JAX f32 reference (training-mode BatchNorm, biased variance)."""
    x = x.astype(jnp.float32)
    h1 = jnp.maximum(x @ params["w1"].T + params["b1"], 0.0)
    z2 = h1 @ params["w2"].T + params["b2"]
    mean = jnp.mean(z2, axis=0)
    var = jnp.mean((z2 - mean) ** 2, axis=0)
    h2 = (z2 - mean) / jnp.sqrt(var + _EPS) * params["gamma"] + params["beta"]
    h2 = jnp.maximum(h2, 0.0)
    y = h2 @ params["w3"].T + params["b3"]
    return jax.nn.sigmoid(y)


if __name__ == "__main__":
    key = jax.random.PRNGKey(0)
    k_x, k_x2, k_p = jax.random.split(key, 3)
    params = init_params(k_p)

    fwd = jax.jit(fully_connected_forward,
                  static_argnames=("tb", "io_dtype", "out_dtype"))

    # Small batch, default bf16 MXU inputs + bf16 output (single tile).
    B = 8
    x = jax.random.normal(k_x, (B, 48), jnp.float32)
    out = jax.block_until_ready(fwd(x, params))
    assert out.shape == (B, 48) and out.dtype == jnp.bfloat16
    ref = _reference(x, params)
    assert jnp.allclose(out.astype(jnp.float32), ref, atol=5e-2), \
        "bf16 path mismatch"

    # f32 I/O path, tight tolerance (single tile).
    out32 = jax.block_until_ready(fwd(x, params, io_dtype=jnp.float32))
    assert out32.dtype == jnp.float32
    assert jnp.allclose(out32, ref, atol=1e-4, rtol=1e-4), "f32 path mismatch"

    # Multi-tile grid: 2-way pass-1 split + padded-tail masking of BN stats.
    B2 = 300
    x2 = jax.random.normal(k_x2, (B2, 48), jnp.float32)
    out2 = jax.block_until_ready(fwd(x2, params, tb=128, io_dtype=jnp.float32))
    assert out2.shape == (B2, 48)
    ref2 = _reference(x2, params)
    assert jnp.allclose(out2, ref2, atol=1e-4, rtol=1e-4), "tiled BN mismatch"

    print("KERNEL_OK")
</pallas_src>

<mosaic_0001>
module attributes {stable_mosaic.version = 11 : i64} {
  func.func @kernel(%arg0: i32, %arg1: i32, %arg2: memref<8x48xf32, #tpu.memory_space<vmem>>, %arg3: memref<48x32xbf16, #tpu.memory_space<vmem>>, %arg4: memref<1x32xf32, #tpu.memory_space<vmem>>, %arg5: memref<32x32xbf16, #tpu.memory_space<vmem>>, %arg6: memref<1x1x32xf32, #tpu.memory_space<vmem>>, %arg7: memref<1x1x32xf32, #tpu.memory_space<vmem>>, %arg8: memref<1x32xf32, #tpu.memory_space<vmem>>, %arg9: memref<1x32xf32, #tpu.memory_space<vmem>>) attributes {dimension_semantics = [#tpu.dimension_semantics<parallel>, #tpu.dimension_semantics<arbitrary>], iteration_bounds = array<i64: 1, 1>, scalar_prefetch = 0 : i64, scratch_operands = 2 : i64, tpu.core_type = #tpu.core_type<tc>, window_params = [{transform_indices = @transform_0, window_bounds = array<i64: 8, 48>}, {pipeline_mode = #tpu.pipeline_mode<synchronous>, transform_indices = @transform_1, window_bounds = array<i64: 48, 32>}, {pipeline_mode = #tpu.pipeline_mode<synchronous>, transform_indices = @transform_2, window_bounds = array<i64: 1, 32>}, {pipeline_mode = #tpu.pipeline_mode<synchronous>, transform_indices = @transform_3, window_bounds = array<i64: 32, 32>}, {transform_indices = @transform_4, window_bounds = array<i64: 1, 1, 32>}, {transform_indices = @transform_5, window_bounds = array<i64: 1, 1, 32>}]} {
    %c0_i32 = arith.constant 0 : i32
    %0 = arith.cmpi eq, %arg1, %c0_i32 : i32
    %1 = arith.extui %0 : i1 to i32
    %c0_i32_0 = arith.constant 0 : i32
    %2 = arith.cmpi ne, %1, %c0_i32_0 : i32
    scf.if %2 {
      %cst_22 = arith.constant 0.000000e+00 : f32
      %29 = vector.broadcast %cst_22 : f32 to vector<1x32xf32>
      %c0_23 = arith.constant 0 : index
      %c0_24 = arith.constant 0 : index
      %30 = vector.load %arg8[%c0_23, %c0_24] : memref<1x32xf32, #tpu.memory_space<vmem>>, vector<1x32xf32>
      tpu.vector_store %arg8[%c0_23, %c0_24], %29 {strides = array<i32>} : memref<1x32xf32, #tpu.memory_space<vmem>>, vector<1x32xf32>,
      %cst_25 = arith.constant 0.000000e+00 : f32
      %31 = vector.broadcast %cst_25 : f32 to vector<1x32xf32>
      %c0_26 = arith.constant 0 : index
      %c0_27 = arith.constant 0 : index
      %32 = vector.load %arg9[%c0_26, %c0_27] : memref<1x32xf32, #tpu.memory_space<vmem>>, vector<1x32xf32>
      tpu.vector_store %arg9[%c0_26, %c0_27], %31 {strides = array<i32>} : memref<1x32xf32, #tpu.memory_space<vmem>>, vector<1x32xf32>,
    } else {
    }
    %c0 = arith.constant 0 : index
    %c0_1 = arith.constant 0 : index
    %3 = vector.load %arg2[%c0, %c0_1] : memref<8x48xf32, #tpu.memory_space<vmem>>, vector<8x48xf32>
    %4 = arith.truncf %3 : vector<8x48xf32> to vector<8x48xbf16>
    %c0_2 = arith.constant 0 : index
    %c0_3 = arith.constant 0 : index
    %5 = vector.load %arg3[%c0_2, %c0_3] : memref<48x32xbf16, #tpu.memory_space<vmem>>, vector<48x32xbf16>
    %cst = arith.constant dense<0.000000e+00> : vector<8x32xf32>
    %6 = tpu.matmul %4, %5, %cst {dimension_numbers = #tpu.dot_dimension_numbers<[1], [0], [0], [1], [0, 0, 1, 1], [], []>} : vector<8x48xbf16>, vector<48x32xbf16>, vector<8x32xf32> -> vector<8x32xf32>
    %c0_4 = arith.constant 0 : index
    %c0_5 = arith.constant 0 : index
    %7 = vector.load %arg4[%c0_4, %c0_5] : memref<1x32xf32, #tpu.memory_space<vmem>>, vector<1x32xf32>
    %8 = vector.broadcast %7 : vector<1x32xf32> to vector<8x32xf32>
    %9 = arith.addf %6, %8 : vector<8x32xf32>
    %cst_6 = arith.constant 0.000000e+00 : f32
    %10 = vector.broadcast %cst_6 : f32 to vector<8x32xf32>
    %11 = arith.maximumf %9, %10 : vector<8x32xf32>
    %12 = arith.truncf %11 : vector<8x32xf32> to vector<8x32xbf16>
    %c0_7 = arith.constant 0 : index
    %c0_8 = arith.constant 0 : index
    %13 = vector.load %arg5[%c0_7, %c0_8] : memref<32x32xbf16, #tpu.memory_space<vmem>>, vector<32x32xbf16>
    %cst_9 = arith.constant dense<0.000000e+00> : vector<8x32xf32>
    %14 = tpu.matmul %12, %13, %cst_9 {dimension_numbers = #tpu.dot_dimension_numbers<[1], [0], [0], [1], [0, 0, 1, 1], [], []>} : vector<8x32xbf16>, vector<32x32xbf16>, vector<8x32xf32> -> vector<8x32xf32>
    %15 = arith.mulf %14, %14 : vector<8x32xf32>
    %c0_10 = arith.constant 0 : index
    %c0_11 = arith.constant 0 : index
    %16 = vector.load %arg8[%c0_10, %c0_11] : memref<1x32xf32, #tpu.memory_space<vmem>>, vector<1x32xf32>
    %cst_12 = arith.constant dense<0.000000e+00> : vector<32xf32>
    %17 = vector.multi_reduction <add>, %14, %cst_12 [0] : vector<8x32xf32> to vector<32xf32>
    %18 = vector.shape_cast %17 : vector<32xf32> to vector<1x32xf32>
    %19 = arith.addf %16, %18 : vector<1x32xf32>
    %c0_13 = arith.constant 0 : index
    %c0_14 = arith.constant 0 : index
    %20 = vector.load %arg8[%c0_13, %c0_14] : memref<1x32xf32, #tpu.memory_space<vmem>>, vector<1x32xf32>
    tpu.vector_store %arg8[%c0_13, %c0_14], %19 {strides = array<i32>} : memref<1x32xf32, #tpu.memory_space<vmem>>, vector<1x32xf32>,
    %c0_15 = arith.constant 0 : index
    %c0_16 = arith.constant 0 : index
    %21 = vector.load %arg9[%c0_15, %c0_16] : memref<1x32xf32, #tpu.memory_space<vmem>>, vector<1x32xf32>
    %cst_17 = arith.constant dense<0.000000e+00> : vector<32xf32>
    %22 = vector.multi_reduction <add>, %15, %cst_17 [0] : vector<8x32xf32> to vector<32xf32>
    %23 = vector.shape_cast %22 : vector<32xf32> to vector<1x32xf32>
    %24 = arith.addf %21, %23 : vector<1x32xf32>
    %c0_18 = arith.constant 0 : index
    %c0_19 = arith.constant 0 : index
    %25 = vector.load %arg9[%c0_18, %c0_19] : memref<1x32xf32, #tpu.memory_space<vmem>>, vector<1x32xf32>
    tpu.vector_store %arg9[%c0_18, %c0_19], %24 {strides = array<i32>} : memref<1x32xf32, #tpu.memory_space<vmem>>, vector<1x32xf32>,
    %c0_i32_20 = arith.constant 0 : i32
    %26 = arith.cmpi eq, %arg1, %c0_i32_20 : i32
    %27 = arith.extui %26 : i1 to i32
    %c0_i32_21 = arith.constant 0 : i32
    %28 = arith.cmpi ne, %27, %c0_i32_21 : i32
    scf.if %28 {
      %c0_22 = arith.constant 0 : index
      %c0_23 = arith.constant 0 : index
      %29 = vector.load %arg8[%c0_22, %c0_23] : memref<1x32xf32, #tpu.memory_space<vmem>>, vector<1x32xf32>
      %c0_24 = arith.constant 0 : index
      %c0_25 = arith.constant 0 : index
      %c0_26 = arith.constant 0 : index
      %30 = vector.load %arg6[%c0_24, %c0_25, %c0_26] : memref<1x1x32xf32, #tpu.memory_space<vmem>>, vector<1x1x32xf32>
      %31 = vector.shape_cast %30 : vector<1x1x32xf32> to vector<1x32xf32>
      %32 = vector.shape_cast %29 : vector<1x32xf32> to vector<1x1x32xf32>
      tpu.vector_store %arg6[%c0_24, %c0_25, %c0_26], %32 {strides = array<i32>} : memref<1x1x32xf32, #tpu.memory_space<vmem>>, vector<1x1x32xf32>,
      %c0_27 = arith.constant 0 : index
      %c0_28 = arith.constant 0 : index
      %33 = vector.load %arg9[%c0_27, %c0_28] : memref<1x32xf32, #tpu.memory_space<vmem>>, vector<1x32xf32>
      %c0_29 = arith.constant 0 : index
      %c0_30 = arith.constant 0 : index
      %c0_31 = arith.constant 0 : index
      %34 = vector.load %arg7[%c0_29, %c0_30, %c0_31] : memref<1x1x32xf32, #tpu.memory_space<vmem>>, vector<1x1x32xf32>
      %35 = vector.shape_cast %34 : vector<1x1x32xf32> to vector<1x32xf32>
      %36 = vector.shape_cast %33 : vector<1x32xf32> to vector<1x1x32xf32>
      tpu.vector_store %arg7[%c0_29, %c0_30, %c0_31], %36 {strides = array<i32>} : memref<1x1x32xf32, #tpu.memory_space<vmem>>, vector<1x1x32xf32>,
    } else {
    }
    return
  }
  func.func @transform_0(%arg0: i32, %arg1: i32) -> (i32, i32) {
    %c1_i32 = arith.constant 1 : i32
    %0 = arith.muli %arg0, %c1_i32 : i32
    %1 = arith.addi %0, %arg1 : i32
    %c0_i32 = arith.constant 0 : i32
    %c0_i32_0 = arith.constant 0 : i32
    return %1, %c0_i32 : i32, i32
  }
  func.func @transform_1(%arg0: i32, %arg1: i32) -> (i32, i32) {
    %c0_i32 = arith.constant 0 : i32
    %c0_i32_0 = arith.constant 0 : i32
    %c0_i32_1 = arith.constant 0 : i32
    return %c0_i32, %c0_i32_0 : i32, i32
  }
  func.func @transform_2(%arg0: i32, %arg1: i32) -> (i32, i32) {
    %c0_i32 = arith.constant 0 : i32
    %c0_i32_0 = arith.constant 0 : i32
    %c0_i32_1 = arith.constant 0 : i32
    return %c0_i32, %c0_i32_0 : i32, i32
  }
  func.func @transform_3(%arg0: i32, %arg1: i32) -> (i32, i32) {
    %c0_i32 = arith.constant 0 : i32
    %c0_i32_0 = arith.constant 0 : i32
    %c0_i32_1 = arith.constant 0 : i32
    return %c0_i32, %c0_i32_0 : i32, i32
  }
  func.func @transform_4(%arg0: i32, %arg1: i32) -> (i32, i32, i32) {
    %c0_i32 = arith.constant 0 : i32
    %c0_i32_0 = arith.constant 0 : i32
    %c0_i32_1 = arith.constant 0 : i32
    return %arg0, %c0_i32, %c0_i32_0 : i32, i32, i32
  }
  func.func @transform_5(%arg0: i32, %arg1: i32) -> (i32, i32, i32) {
    %c0_i32 = arith.constant 0 : i32
    %c0_i32_0 = arith.constant 0 : i32
    %c0_i32_1 = arith.constant 0 : i32
    return %arg0, %c0_i32, %c0_i32_0 : i32, i32, i32
  }
}

module attributes {stable_mosaic.version = 11 : i64} {
  func.func @_forward_kernel(%arg0: i32, %arg1: memref<8x48xf32, #tpu.memory_space<vmem>>, %arg2: memref<48x32xbf16, #tpu.memory_space<vmem>>, %arg3: memref<1x32xf32, #tpu.memory_space<vmem>>, %arg4: memref<32x32xbf16, #tpu.memory_space<vmem>>, %arg5: memref<1x32xf32, #tpu.memory_space<vmem>>, %arg6: memref<32x48xbf16, #tpu.memory_space<vmem>>, %arg7: memref<1x48xf32, #tpu.memory_space<vmem>>, %arg8: memref<8x48xbf16, #tpu.memory_space<vmem>>) attributes {dimension_semantics = [#tpu.dimension_semantics<parallel>], iteration_bounds = array<i64: 1>, scalar_prefetch = 0 : i64, scratch_operands = 0 : i64, tpu.core_type = #tpu.core_type<tc>, window_params = [{transform_indices = @transform_0, window_bounds = array<i64: 8, 48>}, {pipeline_mode = #tpu.pipeline_mode<synchronous>, transform_indices = @transform_1, window_bounds = array<i64: 48, 32>}, {pipeline_mode = #tpu.pipeline_mode<synchronous>, transform_indices = @transform_2, window_bounds = array<i64: 1, 32>}, {pipeline_mode = #tpu.pipeline_mode<synchronous>, transform_indices = @transform_3, window_bounds = array<i64: 32, 32>}, {pipeline_mode = #tpu.pipeline_mode<synchronous>, transform_indices = @transform_4, window_bounds = array<i64: 1, 32>}, {pipeline_mode = #tpu.pipeline_mode<synchronous>, transform_indices = @transform_5, window_bounds = array<i64: 32, 48>}, {pipeline_mode = #tpu.pipeline_mode<synchronous>, transform_indices = @transform_6, window_bounds = array<i64: 1, 48>}, {transform_indices = @transform_7, window_bounds = array<i64: 8, 48>}]} {
    %c0 = arith.constant 0 : index
    %c0_0 = arith.constant 0 : index
    %0 = vector.load %arg1[%c0, %c0_0] : memref<8x48xf32, #tpu.memory_space<vmem>>, vector<8x48xf32>
    %1 = arith.truncf %0 : vector<8x48xf32> to vector<8x48xbf16>
    %c0_1 = arith.constant 0 : index
    %c0_2 = arith.constant 0 : index
    %2 = vector.load %arg2[%c0_1, %c0_2] : memref<48x32xbf16, #tpu.memory_space<vmem>>, vector<48x32xbf16>
    %cst = arith.constant dense<0.000000e+00> : vector<8x32xf32>
    %3 = tpu.matmul %1, %2, %cst {dimension_numbers = #tpu.dot_dimension_numbers<[1], [0], [0], [1], [0, 0, 1, 1], [], []>} : vector<8x48xbf16>, vector<48x32xbf16>, vector<8x32xf32> -> vector<8x32xf32>
    %c0_3 = arith.constant 0 : index
    %c0_4 = arith.constant 0 : index
    %4 = vector.load %arg3[%c0_3, %c0_4] : memref<1x32xf32, #tpu.memory_space<vmem>>, vector<1x32xf32>
    %5 = vector.broadcast %4 : vector<1x32xf32> to vector<8x32xf32>
    %6 = arith.addf %3, %5 : vector<8x32xf32>
    %cst_5 = arith.constant 0.000000e+00 : f32
    %7 = vector.broadcast %cst_5 : f32 to vector<8x32xf32>
    %8 = arith.maximumf %6, %7 : vector<8x32xf32>
    %9 = arith.truncf %8 : vector<8x32xf32> to vector<8x32xbf16>
    %c0_6 = arith.constant 0 : index
    %c0_7 = arith.constant 0 : index
    %10 = vector.load %arg4[%c0_6, %c0_7] : memref<32x32xbf16, #tpu.memory_space<vmem>>, vector<32x32xbf16>
    %cst_8 = arith.constant dense<0.000000e+00> : vector<8x32xf32>
    %11 = tpu.matmul %9, %10, %cst_8 {dimension_numbers = #tpu.dot_dimension_numbers<[1], [0], [0], [1], [0, 0, 1, 1], [], []>} : vector<8x32xbf16>, vector<32x32xbf16>, vector<8x32xf32> -> vector<8x32xf32>
    %c0_9 = arith.constant 0 : index
    %c0_10 = arith.constant 0 : index
    %12 = vector.load %arg5[%c0_9, %c0_10] : memref<1x32xf32, #tpu.memory_space<vmem>>, vector<1x32xf32>
    %13 = vector.broadcast %12 : vector<1x32xf32> to vector<8x32xf32>
    %14 = arith.addf %11, %13 : vector<8x32xf32>
    %cst_11 = arith.constant 0.000000e+00 : f32
    %15 = vector.broadcast %cst_11 : f32 to vector<8x32xf32>
    %16 = arith.maximumf %14, %15 : vector<8x32xf32>
    %17 = arith.truncf %16 : vector<8x32xf32> to vector<8x32xbf16>
    %c0_12 = arith.constant 0 : index
    %c0_13 = arith.constant 0 : index
    %18 = vector.load %arg6[%c0_12, %c0_13] : memref<32x48xbf16, #tpu.memory_space<vmem>>, vector<32x48xbf16>
    %cst_14 = arith.constant dense<0.000000e+00> : vector<8x48xf32>
    %19 = tpu.matmul %17, %18, %cst_14 {dimension_numbers = #tpu.dot_dimension_numbers<[1], [0], [0], [1], [0, 0, 1, 1], [], []>} : vector<8x32xbf16>, vector<32x48xbf16>, vector<8x48xf32> -> vector<8x48xf32>
    %c0_15 = arith.constant 0 : index
    %c0_16 = arith.constant 0 : index
    %20 = vector.load %arg7[%c0_15, %c0_16] : memref<1x48xf32, #tpu.memory_space<vmem>>, vector<1x48xf32>
    %21 = vector.broadcast %20 : vector<1x48xf32> to vector<8x48xf32>
    %22 = arith.addf %19, %21 : vector<8x48xf32>
    %23 = arith.negf %22 : vector<8x48xf32>
    %24 = math.exp %23 : vector<8x48xf32>
    %cst_17 = arith.constant 1.000000e+00 : f32
    %25 = vector.broadcast %cst_17 : f32 to vector<8x48xf32>
    %26 = arith.addf %25, %24 : vector<8x48xf32>
    %27 = arith.divf %25, %26 : vector<8x48xf32>
    %28 = arith.truncf %27 : vector<8x48xf32> to vector<8x48xbf16>
    %c0_18 = arith.constant 0 : index
    %c0_19 = arith.constant 0 : index
    %29 = vector.load %arg8[%c0_18, %c0_19] : memref<8x48xbf16, #tpu.memory_space<vmem>>, vector<8x48xbf16>
    tpu.vector_store %arg8[%c0_18, %c0_19], %28 {strides = array<i32>} : memref<8x48xbf16, #tpu.memory_space<vmem>>, vector<8x48xbf16>,
    return
  }
  func.func @transform_0(%arg0: i32) -> (i32, i32) {
    %c0_i32 = arith.constant 0 : i32
    %c0_i32_0 = arith.constant 0 : i32
    return %arg0, %c0_i32 : i32, i32
  }
  func.func @transform_1(%arg0: i32) -> (i32, i32) {
    %c0_i32 = arith.constant 0 : i32
    %c0_i32_0 = arith.constant 0 : i32
    %c0_i32_1 = arith.constant 0 : i32
    return %c0_i32, %c0_i32_0 : i32, i32
  }
  func.func @transform_2(%arg0: i32) -> (i32, i32) {
    %c0_i32 = arith.constant 0 : i32
    %c0_i32_0 = arith.constant 0 : i32
    %c0_i32_1 = arith.constant 0 : i32
    return %c0_i32, %c0_i32_0 : i32, i32
  }
  func.func @transform_3(%arg0: i32) -> (i32, i32) {
    %c0_i32 = arith.constant 0 : i32
    %c0_i32_0 = arith.constant 0 : i32
    %c0_i32_1 = arith.constant 0 : i32
    return %c0_i32, %c0_i32_0 : i32, i32
  }
  func.func @transform_4(%arg0: i32) -> (i32, i32) {
    %c0_i32 = arith.constant 0 : i32
    %c0_i32_0 = arith.constant 0 : i32
    %c0_i32_1 = arith.constant 0 : i32
    return %c0_i32, %c0_i32_0 : i32, i32
  }
  func.func @transform_5(%arg0: i32) -> (i32, i32) {
    %c0_i32 = arith.constant 0 : i32
    %c0_i32_0 = arith.constant 0 : i32
    %c0_i32_1 = arith.constant 0 : i32
    return %c0_i32, %c0_i32_0 : i32, i32
  }
  func.func @transform_6(%arg0: i32) -> (i32, i32) {
    %c0_i32 = arith.constant 0 : i32
    %c0_i32_0 = arith.constant 0 : i32
    %c0_i32_1 = arith.constant 0 : i32
    return %c0_i32, %c0_i32_0 : i32, i32
  }
  func.func @transform_7(%arg0: i32) -> (i32, i32) {
    %c0_i32 = arith.constant 0 : i32
    %c0_i32_0 = arith.constant 0 : i32
    return %arg0, %c0_i32 : i32, i32
  }
}

</mosaic_0001>

<llo_original>
// kernel: fully_connected_forward.3
$region0: #{fully_connected_forward.3}
  #allocation0 [shape = 'u32[]', space=smem, size = 0x4, offset = 0x4, fixed_abs, tag = 'smem constant byte address 0x4 - core index']
  #allocation1 [shape = 'u32[144,128]{1,0:T(1,128)}', space=vmem, size = 0x12000, scoped, tag = 'internal scratch']
  %s0 = inlined_call_operand.vmem [shape: f32[8,48], index: 0, kind: input, shape index: {}]
  %s1 = inlined_call_operand.vmem [shape: bf16[48,32], index: 1, kind: input, shape index: {}]
  %s2 = inlined_call_operand.vmem [shape: f32[1,32], index: 2, kind: input, shape index: {}]
  %s3 = inlined_call_operand.vmem [shape: bf16[32,32], index: 3, kind: input, shape index: {}]
  %s4 = inlined_call_operand.vmem [shape: f32[1,32], index: 4, kind: input, shape index: {}]
  %s5 = inlined_call_operand.vmem [shape: bf16[32,48], index: 5, kind: input, shape index: {}]
  %s6 = inlined_call_operand.vmem [shape: f32[1,48], index: 6, kind: input, shape index: {}]
  %s7 = inlined_call_operand.hbm [shape: bf16[8,48], index: 7, kind: output, shape index: {}]
  %s8 = sld [smem:[#allocation0]]
  $region38: #{fully_connected_forward.3} parent=0
    _
  %s10 = ssub.s32 1, %s8
  %s11 = scalar_select 0, %s10, %s8
  $region1: #{fully_connected_forward.3} parent=0
    #allocation2 [shape = 'u8[2048]{0}', space=vmem, size = 0x800, scoped, tag = 'output window, operand 0, single buffered']
    #allocation3 [shape = 's32[1]{0}', space=sflag, size = 0x4, scoped, tag = 'scoped memory for fully_connected_forward.3']
    %12 = vsyncpa [#allocation3], 0
    // Predicated region
    $region2: #{fully_connected_forward.3} parent=1 // pred_check
      _
    $region3: #{fully_connected_forward.3} parent=1 // pred_check_branch
      %14 = sbr.rel (0) target = $region5
    $region4: #{fully_connected_forward.3} parent=1 // pred_region
      _
    $region5: #{fully_connected_forward.3} parent=1 // pred_fallthru
      _
    // Predicated region
    $region6: #{fully_connected_forward.3} parent=1 // pred_check
      _
    $region7: #{fully_connected_forward.3} parent=1 // pred_check_branch
      %16 = sbr.rel (0) target = $region9
    $region8: #{fully_connected_forward.3} parent=1 // pred_region
      _
    $region9: #{fully_connected_forward.3} parent=1 // pred_fallthru
      _
    // Predicated region
    $region10: #{fully_connected_forward.3} parent=1 // pred_check
      _
    $region11: #{fully_connected_forward.3} parent=1 // pred_check_branch
      %18 = sbr.rel (0) target = $region13
    $region12: #{fully_connected_forward.3} parent=1 // pred_region
      _
    $region13: #{fully_connected_forward.3} parent=1 // pred_fallthru
      _
    // Predicated region
    $region14: #{fully_connected_forward.3} parent=1 // pred_check
      _
    $region15: #{fully_connected_forward.3} parent=1 // pred_check_branch
      %20 = sbr.rel (0) target = $region17
    $region16: #{fully_connected_forward.3} parent=1 // pred_region
      _
    $region17: #{fully_connected_forward.3} parent=1 // pred_fallthru
      _
    // Predicated region
    $region18: #{fully_connected_forward.3} parent=1 // pred_check
      _
    $region19: #{fully_connected_forward.3} parent=1 // pred_check_branch
      %22 = sbr.rel (0) target = $region21
    $region20: #{fully_connected_forward.3} parent=1 // pred_region
      _
    $region21: #{fully_connected_forward.3} parent=1 // pred_fallthru
      _
    // Predicated region
    $region22: #{fully_connected_forward.3} parent=1 // pred_check
      _
    $region23: #{fully_connected_forward.3} parent=1 // pred_check_branch
      %24 = sbr.rel (0) target = $region25
    $region24: #{fully_connected_forward.3} parent=1 // pred_region
      _
    $region25: #{fully_connected_forward.3} parent=1 // pred_fallthru
      _
    // Predicated region
    $region26: #{fully_connected_forward.3} parent=1 // pred_check
      _
    $region27: #{fully_connected_forward.3} parent=1 // pred_check_branch
      %26 = sbr.rel (0) target = $region29
    $region28: #{fully_connected_forward.3} parent=1 // pred_region
      _
    $region29: #{fully_connected_forward.3} parent=1 // pred_fallthru
      _
    %v28 = vld [vmem:[%s0] sm:$0xff]
    %v29 = vpack.c.bf16 %v28, %v28
    %v30 = vld [vmem:[%s1] sm:$0xf]
    %v31 = vld [vmem:[%s1 + $0x4] sm:$0xf]
    %v32 = vld [vmem:[%s1 + $0x8] sm:$0xf]
    %v33 = vld [vmem:[%s1 + $0xc] sm:$0xf]
    %v34 = vld [vmem:[%s1 + $0x10] sm:$0xf]
    %v35 = vld [vmem:[%s1 + $0x14] sm:$0xf]
    %v36 = vld [vmem:[%s2] sm:$0x1]
    %v38 = vlaneseq
    %v39 = vshrl.u32 %v38, 7
    %v40 = vsub.s32 0, %v39
    %v41 = vrot.slane %v36, %v40
    %v49 = vunpack.c.l.b16 %v30
    %v50 = vunpack.c.l.b16 %v31
    %v51 = vunpack.c.l.b16 %v32
    %v52 = vunpack.c.l.b16 %v33
    %v53 = vunpack.c.l.b16 %v34
    %v54 = vunpack.c.l.b16 %v35
    %v55 = vpack.c.b16 %v50, %v49
    %v56 = vpack.c.b16 %v52, %v51
    %v57 = vpack.c.b16 %v54, %v53
    %vm61 = vcmask 392192
    %v63 = vsel %vm61, %v29, 0
    %65 = vmatprep.subr.bf16.mxu0 0
    %66 = vmatpush1.bf16.msra.mxu0 %v55
    %67 = vmatprep.subr.bf16.mxu0 0
    %68 = vmatpush1.bf16.msra.mxu0 %v56
    %69 = vmatprep.subr.bf16.mxu0 0
    %70 = vmatpush1.bf16.msra.mxu0 %v57
    %71 = vmatprep.subr.bf16.mxu0 0
    %72 = vmatpush1.bf16.msra.mxu0 0
    %73 = vmatprep.subr.bf16.mxu0 0
    %74 = vmatpush1.bf16.msra.mxu0 0
    %75 = vmatprep.subr.bf16.mxu0 0
    %76 = vmatpush1.bf16.msra.mxu0 0
    %77 = vmatprep.subr.bf16.mxu0 0
    %78 = vmatpush1.bf16.msra.mxu0 0
    %79 = vmatprep.subr.bf16.mxu0 0
    %80 = vmatpush1.bf16.msra.mxu0 0
    %81 = vmatprep.subr.bf16.mxu0 0
    %82 = vmatpush1.bf16.msra.mxu0 0
    %83 = vmatprep.subr.bf16.mxu0 0
    %84 = vmatpush1.bf16.msra.mxu0 0
    %85 = vmatprep.subr.bf16.mxu0 0
    %86 = vmatpush1.bf16.msra.mxu0 0
    %87 = vmatprep.subr.bf16.mxu0 0
    %88 = vmatpush1.bf16.msra.mxu0 0
    %89 = vmatprep.subr.bf16.mxu0 0
    %90 = vmatpush1.bf16.msra.mxu0 0
    %91 = vmatprep.subr.bf16.mxu0 0
    %92 = vmatpush1.bf16.msra.mxu0 0
    %93 = vmatprep.subr.bf16.mxu0 0
    %94 = vmatpush1.bf16.msra.mxu0 0
    %95 = vmatprep.subr.bf16.mxu0 0
    %96 = vmatpush1.bf16.msra.mxu0 0
    %97 = vmatprep.mubr.bf16.mxu0 0
    %98 = vmatmul.mubr.bf16.gmra.mrb[0].mxu0 %v63
    %v99 = vpop.f32.mrb[0].mxu0
    %v100 = vadd.f32 %v41, %v99
    %v101 = vpop.f32.mrb[0].mxu0
    %v102 = vpop.f32.mrb[0].mxu0
    %v103 = vpop.f32.mrb[0].mxu0
    %104 = vdwg.mxu0
    %v105 = vmax.f32 %v100, 0.0
    %v106 = vpack.c.bf16 %v105, %v105
    %v107 = vld [vmem:[%s3] sm:$0xf]
    %v108 = vld [vmem:[%s3 + $0x4] sm:$0xf]
    %v109 = vld [vmem:[%s3 + $0x8] sm:$0xf]
    %v110 = vld [vmem:[%s3 + $0xc] sm:$0xf]
    %v111 = vld [vmem:[%s4] sm:$0x1]
    %v113 = vlaneseq
    %v114 = vshrl.u32 %v113, 7
    %v115 = vsub.s32 0, %v114
    %v116 = vrot.slane %v111, %v115
    %v122 = vunpack.c.l.b16 %v107
    %v123 = vunpack.c.l.b16 %v108
    %v124 = vunpack.c.l.b16 %v109
    %v125 = vunpack.c.l.b16 %v110
    %v126 = vpack.c.b16 %v123, %v122
    %v127 = vpack.c.b16 %v125, %v124
    %vm130 = vcmask 261120
    %v132 = vsel %vm130, %v106, 0
    %134 = vmatprep.subr.bf16.mxu0 0
    %135 = vmatpush1.bf16.msra.mxu0 %v126
    %136 = vmatprep.subr.bf16.mxu0 0
    %137 = vmatpush1.bf16.msra.mxu0 %v127
    %138 = vmatprep.subr.bf16.mxu0 0
    %139 = vmatpush1.bf16.msra.mxu0 0
    %140 = vmatprep.subr.bf16.mxu0 0
    %141 = vmatpush1.bf16.msra.mxu0 0
    %142 = vmatprep.subr.bf16.mxu0 0
    %143 = vmatpush1.bf16.msra.mxu0 0
    %144 = vmatprep.subr.bf16.mxu0 0
    %145 = vmatpush1.bf16.msra.mxu0 0
    %146 = vmatprep.subr.bf16.mxu0 0
    %147 = vmatpush1.bf16.msra.mxu0 0
    %148 = vmatprep.subr.bf16.mxu0 0
    %149 = vmatpush1.bf16.msra.mxu0 0
    %150 = vmatprep.subr.bf16.mxu0 0
    %151 = vmatpush1.bf16.msra.mxu0 0
    %152 = vmatprep.subr.bf16.mxu0 0
    %153 = vmatpush1.bf16.msra.mxu0 0
    %154 = vmatprep.subr.bf16.mxu0 0
    %155 = vmatpush1.bf16.msra.mxu0 0
    %156 = vmatprep.subr.bf16.mxu0 0
    %157 = vmatpush1.bf16.msra.mxu0 0
    %158 = vmatprep.subr.bf16.mxu0 0
    %159 = vmatpush1.bf16.msra.mxu0 0
    %160 = vmatprep.subr.bf16.mxu0 0
    %161 = vmatpush1.bf16.msra.mxu0 0
    %162 = vmatprep.subr.bf16.mxu0 0
    %163 = vmatpush1.bf16.msra.mxu0 0
    %164 = vmatprep.subr.bf16.mxu0 0
    %165 = vmatpush1.bf16.msra.mxu0 0
    %166 = vmatprep.mubr.bf16.mxu0 0
    %167 = vmatmul.mubr.bf16.gmra.mrb[0].mxu0 %v132
    %v168 = vpop.f32.mrb[0].mxu0
    %v169 = vadd.f32 %v116, %v168
    %v170 = vpop.f32.mrb[0].mxu0
    %v171 = vpop.f32.mrb[0].mxu0
    %v172 = vpop.f32.mrb[0].mxu0
    %173 = vdwg.mxu0
    %v174 = vmax.f32 %v169, 0.0
    %v175 = vpack.c.bf16 %v174, %v174
    %v176 = vld [vmem:[%s5] sm:$0xf]
    %v177 = vld [vmem:[%s5 + $0x4] sm:$0xf]
    %v178 = vld [vmem:[%s5 + $0x8] sm:$0xf]
    %v179 = vld [vmem:[%s5 + $0xc] sm:$0xf]
    %v180 = vld [vmem:[%s6] sm:$0x1]
    %v182 = vlaneseq
    %v183 = vshrl.u32 %v182, 7
    %v184 = vsub.s32 0, %v183
    %v185 = vrot.slane %v180, %v184
    %v191 = vunpack.c.l.b16 %v176
    %v192 = vunpack.c.l.b16 %v177
    %v193 = vunpack.c.l.b16 %v178
    %v194 = vunpack.c.l.b16 %v179
    %v195 = vpack.c.b16 %v192, %v191
    %v196 = vpack.c.b16 %v194, %v193
    %v200 = vsel %vm130, %v175, 0
    %202 = vmatprep.subr.bf16.mxu0 0
    %203 = vmatpush1.bf16.msra.mxu0 %v195
    %204 = vmatprep.subr.bf16.mxu0 0
    %205 = vmatpush1.bf16.msra.mxu0 %v196
    %206 = vmatprep.subr.bf16.mxu0 0
    %207 = vmatpush1.bf16.msra.mxu0 0
    %208 = vmatprep.subr.bf16.mxu0 0
    %209 = vmatpush1.bf16.msra.mxu0 0
    %210 = vmatprep.subr.bf16.mxu0 0
    %211 = vmatpush1.bf16.msra.mxu0 0
    %212 = vmatprep.subr.bf16.mxu0 0
    %213 = vmatpush1.bf16.msra.mxu0 0
    %214 = vmatprep.subr.bf16.mxu0 0
    %215 = vmatpush1.bf16.msra.mxu0 0
    %216 = vmatprep.subr.bf16.mxu0 0
    %217 = vmatpush1.bf16.msra.mxu0 0
    %218 = vmatprep.subr.bf16.mxu0 0
    %219 = vmatpush1.bf16.msra.mxu0 0
    %220 = vmatprep.subr.bf16.mxu0 0
    %221 = vmatpush1.bf16.msra.mxu0 0
    %222 = vmatprep.subr.bf16.mxu0 0
    %223 = vmatpush1.bf16.msra.mxu0 0
    %224 = vmatprep.subr.bf16.mxu0 0
    %225 = vmatpush1.bf16.msra.mxu0 0
    %226 = vmatprep.subr.bf16.mxu0 0
    %227 = vmatpush1.bf16.msra.mxu0 0
    %228 = vmatprep.subr.bf16.mxu0 0
    %229 = vmatpush1.bf16.msra.mxu0 0
    %230 = vmatprep.subr.bf16.mxu0 0
    %231 = vmatpush1.bf16.msra.mxu0 0
    %232 = vmatprep.subr.bf16.mxu0 0
    %233 = vmatpush1.bf16.msra.mxu0 0
    %234 = vmatprep.mubr.bf16.mxu0 0
    %235 = vmatmul.mubr.bf16.gmra.mrb[0].mxu0 %v200
    %v236 = vpop.f32.mrb[0].mxu0
    %v237 = vadd.f32 %v185, %v236
    %v238 = vpop.f32.mrb[0].mxu0
    %v239 = vpop.f32.mrb[0].mxu0
    %v240 = vpop.f32.mrb[0].mxu0
    %241 = vdwg.mxu0
    %v242 = vxor.u32 %v237, 2147483648
    %v243 = vmul.f32 %v242, 1.442695
    %v244 = vpow.pop %v243
    %v245 = vadd.f32 %v244, 1.0
    %v246 = vrcp.pop %v245
    %v247 = vmul.f32 1.0, %v246
    %v248 = vpack.c.bf16 %v247, %v247
    %vm249 = vcmask 388096
    %250 = vst.msk [vmem:[#allocation2] sm:$0xf] %vm249, %v248
    // Predicated region
    $region30: #{fully_connected_forward.3} parent=1 // pred_check
      _
    $region31: #{fully_connected_forward.3} parent=1 // pred_check_branch
      %252 = sbr.rel (0) target = $region33
    $region32: #{fully_connected_forward.3} parent=1 // pred_region
      %s254 = ssub.s32 64, 64
      %255 = vsyncadd [#allocation3], %s254
      %s257 = sshll.u32 [#allocation2], 4
      %s258 = int_to_ptr.vmem [resolvable:$true] %s257
      %260 = dma.vmem_to_hbm [thread:$0]  %s258, 64, %s7, [#allocation3]
    $region33: #{fully_connected_forward.3} parent=1 // pred_fallthru
      _
    // Predicated region
    $region34: #{fully_connected_forward.3} parent=1 // pred_check
      _
    $region35: #{fully_connected_forward.3} parent=1 // pred_check_branch
      %262 = sbr.rel (0) target = $region37
    $region36: #{fully_connected_forward.3} parent=1 // pred_region
      %263 = dma.done [#allocation3], 64
    $region37: #{fully_connected_forward.3} parent=1 // pred_fallthru
      _
    %264 = vsyncpa [#allocation3], 1

// kernel: fully_connected_forward.2
$region0: #{fully_connected_forward.2}
  #allocation0 [shape = 'u32[]', space=smem, size = 0x4, offset = 0x4, fixed_abs, tag = 'smem constant byte address 0x4 - core index']
  #allocation1 [shape = 'u32[144,128]{1,0:T(1,128)}', space=vmem, size = 0x12000, scoped, tag = 'internal scratch']
  #allocation2 [shape = 'f32[1,32]{1,0:T(1,128)}', space=vmem, size = 0x200, scoped, tag = 'scratch operand']
  #allocation3 [shape = 'f32[1,32]{1,0:T(1,128)}', space=vmem, size = 0x200, scoped, tag = 'scratch operand']
  %s0 = inlined_call_operand.vmem [shape: f32[8,48], index: 0, kind: input, shape index: {}]
  %s1 = inlined_call_operand.vmem [shape: bf16[48,32], index: 1, kind: input, shape index: {}]
  %s2 = inlined_call_operand.vmem [shape: f32[1,32], index: 2, kind: input, shape index: {}]
  %s3 = inlined_call_operand.vmem [shape: bf16[32,32], index: 3, kind: input, shape index: {}]
  %s4 = inlined_call_operand.vmem [shape: f32[1,1,32], index: 4, kind: output, shape index: {0}]
  %s5 = inlined_call_operand.vmem [shape: f32[1,1,32], index: 5, kind: output, shape index: {1}]
  %6 = xla_tuple %s4, %s5
  %s7 = sld [smem:[#allocation0]]
  $region42: #{fully_connected_forward.2} parent=0
    _
  %s9 = ssub.s32 1, %s7
  %s10 = scalar_select 0, %s9, %s7
  // Predicated region
  $region2: #{fully_connected_forward.2} parent=0 // pred_check
    _
  $region3: #{fully_connected_forward.2} parent=0 // pred_check_branch
    %12 = sbr.rel (0) target = $region5
  $region4: #{fully_connected_forward.2} parent=0 // pred_region
    %s13 = sadd.s32 0, 0
    %p14 = scmp.lt.s32.totalorder %s13, 0
    %s15 = scalar_select %p14, %s13, 0
    %s16 = smul.addr %s15, 8
    %s17 = scalar_lea.vmem %s0, %s16
    %s18 = sadd.s32 0, 0
  $region5: #{fully_connected_forward.2} parent=0 // pred_fallthru
    _
  // Predicated region
  $region6: #{fully_connected_forward.2} parent=0 // pred_check
    _
  $region7: #{fully_connected_forward.2} parent=0 // pred_check_branch
    %20 = sbr.rel (0) target = $region9
  $region8: #{fully_connected_forward.2} parent=0 // pred_region
    _
  $region9: #{fully_connected_forward.2} parent=0 // pred_fallthru
    _
  // Predicated region
  $region10: #{fully_connected_forward.2} parent=0 // pred_check
    _
  $region11: #{fully_connected_forward.2} parent=0 // pred_check_branch
    %22 = sbr.rel (0) target = $region13
  $region12: #{fully_connected_forward.2} parent=0 // pred_region
    _
  $region13: #{fully_connected_forward.2} parent=0 // pred_fallthru
    _
  // Predicated region
  $region14: #{fully_connected_forward.2} parent=0 // pred_check
    _
  $region15: #{fully_connected_forward.2} parent=0 // pred_check_branch
    %24 = sbr.rel (0) target = $region17
  $region16: #{fully_connected_forward.2} parent=0 // pred_region
    _
  $region17: #{fully_connected_forward.2} parent=0 // pred_fallthru
    _
  %s25 = sadd.s32 0, 0
  %p26 = scmp.lt.s32.totalorder %s25, 0
  %s27 = scalar_select %p26, %s25, 0
  %s28 = smul.addr %s27, 8
  %s29 = scalar_lea.vmem %s0, %s28
  %s30 = sadd.s32 0, 0
  %p31 = scmp.lt.s32.totalorder %s30, 0
  %s32 = scalar_select %p31, %s30, 0
  %s33 = smul.addr %s32, 8
  %s34 = scalar_lea.vmem %s0, %s33
  %s35 = sadd.s32 0, 0
  %p37 = scmp.eq.s32.totalorder 0, 0
  // Predicated region
  $region18: #{fully_connected_forward.2} parent=0 // pred_check
    %p38 = pneg %p37
  $region19: #{fully_connected_forward.2} parent=0 // pred_check_branch
    %40 = sbr.rel (%p38) target = $region21
  $region20: #{fully_connected_forward.2} parent=0 // pred_region
    %vm41 = vcmask 253952
    %42 = vst.msk [vmem:[#allocation2] sm:$0x1] %vm41, 0.0
    %43 = vst.msk [vmem:[#allocation3] sm:$0x1] %vm41, 0.0
  $region21: #{fully_connected_forward.2} parent=0 // pred_fallthru
    _
  %v44 = vld [vmem:[%s34] sm:$0xff]
  %v45 = vpack.c.bf16 %v44, %v44
  %v46 = vld [vmem:[%s1] sm:$0xf]
  %v47 = vld [vmem:[%s1 + $0x4] sm:$0xf]
  %v48 = vld [vmem:[%s1 + $0x8] sm:$0xf]
  %v49 = vld [vmem:[%s1 + $0xc] sm:$0xf]
  %v50 = vld [vmem:[%s1 + $0x10] sm:$0xf]
  %v51 = vld [vmem:[%s1 + $0x14] sm:$0xf]
  %v52 = vld [vmem:[%s2] sm:$0x1]
  %v54 = vlaneseq
  %v55 = vshrl.u32 %v54, 7
  %v56 = vsub.s32 0, %v55
  %v57 = vrot.slane %v52, %v56
  %v65 = vunpack.c.l.b16 %v46
  %v66 = vunpack.c.l.b16 %v47
  %v67 = vunpack.c.l.b16 %v48
  %v68 = vunpack.c.l.b16 %v49
  %v69 = vunpack.c.l.b16 %v50
  %v70 = vunpack.c.l.b16 %v51
  %v71 = vpack.c.b16 %v66, %v65
  %v72 = vpack.c.b16 %v68, %v67
  %v73 = vpack.c.b16 %v70, %v69
  %vm77 = vcmask 392192
  %v79 = vsel %vm77, %v45, 0
  %81 = vmatprep.subr.bf16.mxu0 0
  %82 = vmatpush1.bf16.msra.mxu0 %v71
  %83 = vmatprep.subr.bf16.mxu0 0
  %84 = vmatpush1.bf16.msra.mxu0 %v72
  %85 = vmatprep.subr.bf16.mxu0 0
  %86 = vmatpush1.bf16.msra.mxu0 %v73
  %87 = vmatprep.subr.bf16.mxu0 0
  %88 = vmatpush1.bf16.msra.mxu0 0
  %89 = vmatprep.subr.bf16.mxu0 0
  %90 = vmatpush1.bf16.msra.mxu0 0
  %91 = vmatprep.subr.bf16.mxu0 0
  %92 = vmatpush1.bf16.msra.mxu0 0
  %93 = vmatprep.subr.bf16.mxu0 0
  %94 = vmatpush1.bf16.msra.mxu0 0
  %95 = vmatprep.subr.bf16.mxu0 0
  %96 = vmatpush1.bf16.msra.mxu0 0
  %97 = vmatprep.subr.bf16.mxu0 0
  %98 = vmatpush1.bf16.msra.mxu0 0
  %99 = vmatprep.subr.bf16.mxu0 0
  %100 = vmatpush1.bf16.msra.mxu0 0
  %101 = vmatprep.subr.bf16.mxu0 0
  %102 = vmatpush1.bf16.msra.mxu0 0
  %103 = vmatprep.subr.bf16.mxu0 0
  %104 = vmatpush1.bf16.msra.mxu0 0
  %105 = vmatprep.subr.bf16.mxu0 0
  %106 = vmatpush1.bf16.msra.mxu0 0
  %107 = vmatprep.subr.bf16.mxu0 0
  %108 = vmatpush1.bf16.msra.mxu0 0
  %109 = vmatprep.subr.bf16.mxu0 0
  %110 = vmatpush1.bf16.msra.mxu0 0
  %111 = vmatprep.subr.bf16.mxu0 0
  %112 = vmatpush1.bf16.msra.mxu0 0
  %113 = vmatprep.mubr.bf16.mxu0 0
  %114 = vmatmul.mubr.bf16.gmra.mrb[0].mxu0 %v79
  %v115 = vpop.f32.mrb[0].mxu0
  %v116 = vadd.f32 %v57, %v115
  %v117 = vpop.f32.mrb[0].mxu0
  %v118 = vpop.f32.mrb[0].mxu0
  %v119 = vpop.f32.mrb[0].mxu0
  %120 = vdwg.mxu0
  %v121 = vmax.f32 %v116, 0.0
  %v122 = vpack.c.bf16 %v121, %v121
  %v123 = vld [vmem:[%s3] sm:$0xf]
  %v124 = vld [vmem:[%s3 + $0x4] sm:$0xf]
  %v125 = vld [vmem:[%s3 + $0x8] sm:$0xf]
  %v126 = vld [vmem:[%s3 + $0xc] sm:$0xf]
  %v131 = vunpack.c.l.b16 %v123
  %v132 = vunpack.c.l.b16 %v124
  %v133 = vunpack.c.l.b16 %v125
  %v134 = vunpack.c.l.b16 %v126
  %v135 = vpack.c.b16 %v132, %v131
  %v136 = vpack.c.b16 %v134, %v133
  %vm139 = vcmask 261120
  %v141 = vsel %vm139, %v122, 0
  %143 = vmatprep.subr.bf16.mxu0 0
  %144 = vmatpush1.bf16.msra.mxu0 %v135
  %145 = vmatprep.subr.bf16.mxu0 0
  %146 = vmatpush1.bf16.msra.mxu0 %v136
  %147 = vmatprep.subr.bf16.mxu0 0
  %148 = vmatpush1.bf16.msra.mxu0 0
  %149 = vmatprep.subr.bf16.mxu0 0
  %150 = vmatpush1.bf16.msra.mxu0 0
  %151 = vmatprep.subr.bf16.mxu0 0
  %152 = vmatpush1.bf16.msra.mxu0 0
  %153 = vmatprep.subr.bf16.mxu0 0
  %154 = vmatpush1.bf16.msra.mxu0 0
  %155 = vmatprep.subr.bf16.mxu0 0
  %156 = vmatpush1.bf16.msra.mxu0 0
  %157 = vmatprep.subr.bf16.mxu0 0
  %158 = vmatpush1.bf16.msra.mxu0 0
  %159 = vmatprep.subr.bf16.mxu0 0
  %160 = vmatpush1.bf16.msra.mxu0 0
  %161 = vmatprep.subr.bf16.mxu0 0
  %162 = vmatpush1.bf16.msra.mxu0 0
  %163 = vmatprep.subr.bf16.mxu0 0
  %164 = vmatpush1.bf16.msra.mxu0 0
  %165 = vmatprep.subr.bf16.mxu0 0
  %166 = vmatpush1.bf16.msra.mxu0 0
  %167 = vmatprep.subr.bf16.mxu0 0
  %168 = vmatpush1.bf16.msra.mxu0 0
  %169 = vmatprep.subr.bf16.mxu0 0
  %170 = vmatpush1.bf16.msra.mxu0 0
  %171 = vmatprep.subr.bf16.mxu0 0
  %172 = vmatpush1.bf16.msra.mxu0 0
  %173 = vmatprep.subr.bf16.mxu0 0
  %174 = vmatpush1.bf16.msra.mxu0 0
  %175 = vmatprep.mubr.bf16.mxu0 0
  %176 = vmatmul.mubr.bf16.gmra.mrb[0].mxu0 %v141
  %v177 = vpop.f32.mrb[0].mxu0
  %v178 = vadd.f32 0.0, %v177
  %v179 = vpop.f32.mrb[0].mxu0
  %v180 = vpop.f32.mrb[0].mxu0
  %v181 = vpop.f32.mrb[0].mxu0
  %182 = vdwg.mxu0
  %v183 = vmul.f32 %v178, %v178
  %v184 = vld [vmem:[#allocation2] sm:$0x1]
  %v185 = vsel %vm139, %v178, 0.0
  %v186 = vrot.slane %v185, 4
  %v187 = vadd.f32 %v185, %v186
  %v188 = vrot.slane %v187, 2
  %v189 = vadd.f32 %v187, %v188
  %v190 = vrot.slane %v189, 1
  %v191 = vadd.f32 %v189, %v190
  %v192 = vadd.f32 %v184, %v191
  %vm193 = vcmask 253952
  %194 = vst.msk [vmem:[#allocation2] sm:$0x1] %vm193, %v192
  %v195 = vld [vmem:[#allocation3] sm:$0x1]
  %v196 = vsel %vm139, %v183, 0.0
  %v197 = vrot.slane %v196, 4
  %v198 = vadd.f32 %v196, %v197
  %v199 = vrot.slane %v198, 2
  %v200 = vadd.f32 %v198, %v199
  %v201 = vrot.slane %v200, 1
  %v202 = vadd.f32 %v200, %v201
  %v203 = vadd.f32 %v195, %v202
  %204 = vst.msk [vmem:[#allocation3] sm:$0x1] %vm193, %v203
  // Predicated region
  $region22: #{fully_connected_forward.2} parent=0 // pred_check
    %p205 = pneg %p37
  $region23: #{fully_connected_forward.2} parent=0 // pred_check_branch
    %207 = sbr.rel (%p205) target = $region25
  $region24: #{fully_connected_forward.2} parent=0 // pred_region
    %v208 = vld [vmem:[#allocation2] sm:$0x1]
    %209 = vst.msk [vmem:[%s4] sm:$0x1] %vm193, %v208
    %v210 = vld [vmem:[#allocation3] sm:$0x1]
    %211 = vst.msk [vmem:[%s5] sm:$0x1] %vm193, %v210
  $region25: #{fully_connected_forward.2} parent=0 // pred_fallthru
    _
  // Predicated region
  $region26: #{fully_connected_forward.2} parent=0 // pred_check
    _
  $region27: #{fully_connected_forward.2} parent=0 // pred_check_branch
    %213 = sbr.rel (0) target = $region29
  $region28: #{fully_connected_forward.2} parent=0 // pred_region
    _
  $region29: #{fully_connected_forward.2} parent=0 // pred_fallthru
    _
  // Predicated region
  $region30: #{fully_connected_forward.2} parent=0 // pred_check
    _
  $region31: #{fully_connected_forward.2} parent=0 // pred_check_branch
    %215 = sbr.rel (0) target = $region33
  $region32: #{fully_connected_forward.2} parent=0 // pred_region
    _
  $region33: #{fully_connected_forward.2} parent=0 // pred_fallthru
    _
  // Predicated region
  $region34: #{fully_connected_forward.2} parent=0 // pred_check
    _
  $region35: #{fully_connected_forward.2} parent=0 // pred_check_branch
    %217 = sbr.rel (0) target = $region37
  $region36: #{fully_connected_forward.2} parent=0 // pred_region
    _
  $region37: #{fully_connected_forward.2} parent=0 // pred_fallthru
    _
  // Predicated region
  $region38: #{fully_connected_forward.2} parent=0 // pred_check
    _
  $region39: #{fully_connected_forward.2} parent=0 // pred_check_branch
    %219 = sbr.rel (0) target = $region41
  $region40: #{fully_connected_forward.2} parent=0 // pred_region
    _
  $region41: #{fully_connected_forward.2} parent=0 // pred_fallthru
    _

</llo_original>
